<compile_context>
chip_gen: v5e
topology: v5e:2x2
jax: 0.10.0
libtpu: 0.0.40
codegen_flags: <defaults>
</compile_context>

<pallas_src>
import functools

import jax
import jax.numpy as jnp
from jax.experimental import pallas as pl
from jax.experimental.pallas import tpu as pltpu


def _triplet_loss_kernel(a_ref, p_ref, n_ref, o_ref, *,
                         margin, batch, block_rows):
    a = a_ref[...].astype(jnp.float32)
    p = p_ref[...].astype(jnp.float32)
    n = n_ref[...].astype(jnp.float32)

    # Fused elementwise difference of squared distances -> ONE cross-lane sum
    # (halves XLU work vs two separate .sum(1)s); keepdims keeps it 2-D.
    d = (a - p) ** 2 - (a - n) ** 2                            # (TB, D)  VPU
    per_row = jnp.sum(d, axis=1, keepdims=True)                # (TB, 1)  XLU
    losses = jnp.maximum(per_row + jnp.float32(margin), 0.0)   # relu

    if batch % block_rows != 0:
        # Ragged last tile: padded rows (possibly garbage / NaN) must not add
        # `margin` to the sum; jnp.where drops them regardless of NaN.
        i = pl.program_id(0)
        row_ids = i * block_rows + jax.lax.broadcasted_iota(
            jnp.int32, (block_rows, 1), 0)
        losses = jnp.where(row_ids < batch, losses, 0.0)

    # Independent per-tile partial sum -> this grid axis can be "parallel"
    # (v7x shards tiles across both TensorCores).
    o_ref[...] = jnp.sum(losses).reshape(1, 1, 1)


def _target_block_bytes():
    """Per-input block size tuned per TPU generation (safe 2 MiB fallback)."""
    try:
        kind = jax.devices()[0].device_kind.lower()
    except Exception:  # pragma: no cover - CPU/interpret fallback
        return 2 << 20
    if "v7" in kind:
        return 4 << 20          # 3.2 TB/s: amortize 0.35 us/step overhead
    if "v6" in kind:
        return 2 << 20          # ~1.4 TB/s
    if "v5e" in kind or ("v5" in kind and "lite" in kind):
        return 1 << 20          # ~820 GB/s: bigger buys <1-2%
    return 2 << 20


# 3 inputs x 2 pipeline buffers of block_rows x D must stay under this budget
# so double-buffering survives inside the 32 MiB scoped VMEM limit (and v7x's
# 64 MiB physical VMEM).
_PIPELINE_BUDGET_BYTES = 24 << 20


def _choose_block_rows(batch, feat, dtype, target_bytes):
    itemsize = jnp.dtype(dtype).itemsize
    # dtype-aware sublane granularity: 8 for f32, 16 for bf16, 32 for int8/fp8.
    sub = max(8, 32 // max(itemsize, 1))

    row_bytes = max(feat * itemsize, 1)
    rows = target_bytes // row_bytes
    rows = max(sub, (rows // sub) * sub)

    # Wide-D guard: keep 3 inputs x 2 buffers under the pipeline budget.
    while rows > sub and 6 * rows * row_bytes > _PIPELINE_BUDGET_BYTES:
        rows -= sub

    if batch <= rows:
        return batch            # single full-height tile is always legal
    return rows


def triplet_loss(anchor, positive, negative, margin=0.3, block_rows=None):
    """Pallas TPU implementation of TripletLoss.forward -> scalar f32."""
    assert anchor.shape == positive.shape == negative.shape
    assert anchor.ndim == 2
    B, D = anchor.shape
    itemsize = jnp.dtype(anchor.dtype).itemsize

    if block_rows is None:
        block_rows = _choose_block_rows(B, D, anchor.dtype,
                                        _target_block_bytes())
    tb = int(block_rows)
    num_tiles = pl.cdiv(B, tb)

    # VMEM limit: 32 MiB covers the (clamped) pipeline footprint; only raise
    # (capped for v7x's 64 MiB physical VMEM) if a single minimum-height block
    # is already huge (ultra-wide D).  TODO(synk): split D instead (see top).
    footprint = 6 * tb * D * itemsize
    vmem_limit = max(32 << 20, min(int(footprint * 1.25) + (4 << 20), 48 << 20))

    kernel = functools.partial(
        _triplet_loss_kernel, margin=float(margin), batch=B, block_rows=tb)

    emb_spec = pl.BlockSpec((tb, D), lambda i: (i, 0))

    partials = pl.pallas_call(
        kernel,
        out_shape=jax.ShapeDtypeStruct((num_tiles, 1, 1), jnp.float32),
        grid_spec=pltpu.PrefetchScalarGridSpec(
            num_scalar_prefetch=0,
            grid=(num_tiles,),
            in_specs=[emb_spec, emb_spec, emb_spec],
            out_specs=pl.BlockSpec((1, 1, 1), lambda i: (i, 0, 0)),
        ),
        compiler_params=pltpu.CompilerParams(
            # Each tile writes its own output block -> fully parallel axis
            # (v7x megacore shards it; no-op on single-TC chips).
            dimension_semantics=("parallel",),
            vmem_limit_bytes=vmem_limit,
        ),
    )(anchor, positive, negative)

    # Final tiny reduction + mean over the TRUE batch size in the wrapper.
    return jnp.sum(partials) / jnp.float32(B)


def triplet_loss_ref(anchor, positive, negative, margin=0.3):
    a = anchor.astype(jnp.float32)
    p = positive.astype(jnp.float32)
    n = negative.astype(jnp.float32)
    dp = jnp.sum((a - p) ** 2, axis=1)
    dn = jnp.sum((a - n) ** 2, axis=1)
    return jnp.mean(jnp.maximum(dp - dn + margin, 0.0))


if __name__ == "__main__":
    key = jax.random.PRNGKey(0)
    k_a, k_p, k_n = jax.random.split(key, 3)

    B, D = 20, 128  # B deliberately not a multiple of 8 to exercise masking
    anchor = jax.random.normal(k_a, (B, D), dtype=jnp.float32)
    positive = jax.random.normal(k_p, (B, D), dtype=jnp.float32)
    negative = jax.random.normal(k_n, (B, D), dtype=jnp.float32)

    ref = triplet_loss_ref(anchor, positive, negative, margin=0.3)

    # Default path (auto-sized -> single full-height tile at this small B).
    out0 = jax.block_until_ready(
        triplet_loss(anchor, positive, negative, margin=0.3))
    assert jnp.allclose(out0, ref, rtol=1e-5, atol=1e-5), (out0, ref)

    # Gridded path with a ragged last tile (20 rows, 8-row blocks -> 3 steps,
    # per-tile partial sums reduced in the wrapper).
    out1 = jax.block_until_ready(
        triplet_loss(anchor, positive, negative, margin=0.3, block_rows=8))
    assert jnp.allclose(out1, ref, rtol=1e-5, atol=1e-5), (out1, ref)

    # bf16 storage path (kernel upcasts in-vreg; half the HBM bytes).
    a16, p16, n16 = (x.astype(jnp.bfloat16) for x in (anchor, positive, negative))
    ref16 = triplet_loss_ref(a16, p16, n16, margin=0.3)
    out2 = jax.block_until_ready(triplet_loss(a16, p16, n16, margin=0.3))
    assert jnp.allclose(out2, ref16, rtol=1e-4, atol=1e-4), (out2, ref16)

    print("KERNEL_OK")
</pallas_src>

<mosaic_0001>
module attributes {stable_mosaic.version = 11 : i64} {
  func.func @_triplet_loss_kernel(%arg0: i32, %arg1: memref<20x128xf32, #tpu.memory_space<vmem>>, %arg2: memref<20x128xf32, #tpu.memory_space<vmem>>, %arg3: memref<20x128xf32, #tpu.memory_space<vmem>>, %arg4: memref<1x1x1xf32, #tpu.memory_space<vmem>>) attributes {dimension_semantics = [#tpu.dimension_semantics<parallel>], iteration_bounds = array<i64: 1>, scalar_prefetch = 0 : i64, scratch_operands = 0 : i64, tpu.core_type = #tpu.core_type<tc>, window_params = [{transform_indices = @transform_0, window_bounds = array<i64: 20, 128>}, {transform_indices = @transform_1, window_bounds = array<i64: 20, 128>}, {transform_indices = @transform_2, window_bounds = array<i64: 20, 128>}, {transform_indices = @transform_3, window_bounds = array<i64: 1, 1, 1>}]} {
    %c0 = arith.constant 0 : index
    %c0_0 = arith.constant 0 : index
    %0 = vector.load %arg1[%c0, %c0_0] : memref<20x128xf32, #tpu.memory_space<vmem>>, vector<20x128xf32>
    %c0_1 = arith.constant 0 : index
    %c0_2 = arith.constant 0 : index
    %1 = vector.load %arg2[%c0_1, %c0_2] : memref<20x128xf32, #tpu.memory_space<vmem>>, vector<20x128xf32>
    %c0_3 = arith.constant 0 : index
    %c0_4 = arith.constant 0 : index
    %2 = vector.load %arg3[%c0_3, %c0_4] : memref<20x128xf32, #tpu.memory_space<vmem>>, vector<20x128xf32>
    %3 = arith.subf %0, %1 : vector<20x128xf32>
    %4 = arith.mulf %3, %3 : vector<20x128xf32>
    %5 = arith.subf %0, %2 : vector<20x128xf32>
    %6 = arith.mulf %5, %5 : vector<20x128xf32>
    %7 = arith.subf %4, %6 : vector<20x128xf32>
    %cst = arith.constant dense<0.000000e+00> : vector<20xf32>
    %8 = vector.multi_reduction <add>, %7, %cst [1] : vector<20x128xf32> to vector<20xf32>
    %9 = vector.shape_cast %8 : vector<20xf32> to vector<20x1xf32>
    %cst_5 = arith.constant 3.000000e-01 : f32
    %10 = vector.broadcast %cst_5 : f32 to vector<20x1xf32>
    %11 = arith.addf %9, %10 : vector<20x1xf32>
    %cst_6 = arith.constant 0.000000e+00 : f32
    %12 = vector.broadcast %cst_6 : f32 to vector<20x1xf32>
    %13 = arith.maximumf %11, %12 : vector<20x1xf32>
    %14 = vector.shape_cast %13 : vector<20x1xf32> to vector<1x20x1xf32>
    %cst_7 = arith.constant dense<0.000000e+00> : vector<1xf32>
    %15 = vector.multi_reduction <add>, %14, %cst_7 [1, 2] : vector<1x20x1xf32> to vector<1xf32>
    %16 = vector.shape_cast %15 : vector<1xf32> to vector<1x1x1xf32>
    %17 = vector.extract %16[0, 0, 0] : f32 from vector<1x1x1xf32>
    %18 = vector.broadcast %17 : f32 to vector<1x1x1xf32>
    %c0_8 = arith.constant 0 : index
    %c0_9 = arith.constant 0 : index
    %c0_10 = arith.constant 0 : index
    %19 = vector.load %arg4[%c0_8, %c0_9, %c0_10] : memref<1x1x1xf32, #tpu.memory_space<vmem>>, vector<1x1x1xf32>
    tpu.vector_store %arg4[%c0_8, %c0_9, %c0_10], %18 {strides = array<i32>} : memref<1x1x1xf32, #tpu.memory_space<vmem>>, vector<1x1x1xf32>,
    return
  }
  func.func @transform_0(%arg0: i32) -> (i32, i32) {
    %c0_i32 = arith.constant 0 : i32
    %c0_i32_0 = arith.constant 0 : i32
    return %arg0, %c0_i32 : i32, i32
  }
  func.func @transform_1(%arg0: i32) -> (i32, i32) {
    %c0_i32 = arith.constant 0 : i32
    %c0_i32_0 = arith.constant 0 : i32
    return %arg0, %c0_i32 : i32, i32
  }
  func.func @transform_2(%arg0: i32) -> (i32, i32) {
    %c0_i32 = arith.constant 0 : i32
    %c0_i32_0 = arith.constant 0 : i32
    return %arg0, %c0_i32 : i32, i32
  }
  func.func @transform_3(%arg0: i32) -> (i32, i32, i32) {
    %c0_i32 = arith.constant 0 : i32
    %c0_i32_0 = arith.constant 0 : i32
    %c0_i32_1 = arith.constant 0 : i32
    return %arg0, %c0_i32, %c0_i32_0 : i32, i32, i32
  }
}

</mosaic_0001>

<llo_original>
// kernel: tpu_custom_call.1
$region0: #{tpu_custom_call.1}
  #allocation0 [shape = 'u32[]', space=smem, size = 0x4, offset = 0x4, fixed_abs, tag = 'smem constant byte address 0x4 - core index']
  #allocation1 [shape = 'u32[72,128]{1,0:T(1,128)}', space=vmem, size = 0x9000, scoped, tag = 'internal scratch']
  %s0 = inlined_call_operand.hbm [shape: f32[20,128], index: 0, kind: input, shape index: {}]
  %s1 = inlined_call_operand.hbm [shape: f32[20,128], index: 1, kind: input, shape index: {}]
  %s2 = inlined_call_operand.hbm [shape: f32[20,128], index: 2, kind: input, shape index: {}]
  %s3 = inlined_call_operand.hbm [shape: f32[1,1,1], index: 3, kind: output, shape index: {}]
  %s4 = sld [smem:[#allocation0]]
  $region34: #{tpu_custom_call.1} parent=0
    _
  %s6 = ssub.s32 1, %s4
  %s7 = scalar_select 0, %s6, %s4
  $region1: #{tpu_custom_call.1} parent=0
    #allocation2 [shape = 'u8[12288]{0}', space=vmem, size = 0x3000, scoped, tag = 'input window, operand 0, single buffered']
    #allocation3 [shape = 's32[1]{0}', space=sflag, size = 0x4, scoped, tag = 'scoped memory for tpu_custom_call.1']
    #allocation4 [shape = 's32[1]{0}', space=sflag, size = 0x4, scoped, tag = 'scoped memory for tpu_custom_call.1']
    #allocation5 [shape = 'u8[12288]{0}', space=vmem, size = 0x3000, scoped, tag = 'input window, operand 1, single buffered']
    #allocation6 [shape = 's32[1]{0}', space=sflag, size = 0x4, scoped, tag = 'scoped memory for tpu_custom_call.1']
    #allocation7 [shape = 'u8[12288]{0}', space=vmem, size = 0x3000, scoped, tag = 'input window, operand 2, single buffered']
    #allocation8 [shape = 'u8[512]{0}', space=vmem, size = 0x400, scoped, tag = 'output window, operand 0, single buffered']
    %8 = vsyncpa [#allocation3], 0
    %9 = vsyncpa [#allocation6], 0
    %10 = vsyncpa [#allocation4], 0
    // Predicated region
    $region2: #{tpu_custom_call.1} parent=1 // pred_check
      _
    $region3: #{tpu_custom_call.1} parent=1 // pred_check_branch
      %12 = sbr.rel (0) target = $region5
    $region4: #{tpu_custom_call.1} parent=1 // pred_region
      %14 = vsyncadd [#allocation3], 0
      %s15 = sshll.u32 %s0, 4
      %s16 = int_to_ptr.hbm [resolvable:$true] %s15
      %s17 = sshll.u32 [#allocation2], 4
      %s18 = int_to_ptr.vmem [resolvable:$true] %s17
      %23 = dma.hbm_to_vmem [thread:$0]  %s16, 384, %s18, [#allocation3], 128, 128, 8
    $region5: #{tpu_custom_call.1} parent=1 // pred_fallthru
      _
    // Predicated region
    $region6: #{tpu_custom_call.1} parent=1 // pred_check
      _
    $region7: #{tpu_custom_call.1} parent=1 // pred_check_branch
      %25 = sbr.rel (0) target = $region9
    $region8: #{tpu_custom_call.1} parent=1 // pred_region
      %27 = vsyncadd [#allocation6], 0
      %s28 = sshll.u32 %s1, 4
      %s29 = int_to_ptr.hbm [resolvable:$true] %s28
      %s30 = sshll.u32 [#allocation5], 4
      %s31 = int_to_ptr.vmem [resolvable:$true] %s30
      %36 = dma.hbm_to_vmem [thread:$0]  %s29, 384, %s31, [#allocation6], 128, 128, 8
    $region9: #{tpu_custom_call.1} parent=1 // pred_fallthru
      _
    // Predicated region
    $region10: #{tpu_custom_call.1} parent=1 // pred_check
      _
    $region11: #{tpu_custom_call.1} parent=1 // pred_check_branch
      %38 = sbr.rel (0) target = $region13
    $region12: #{tpu_custom_call.1} parent=1 // pred_region
      %40 = vsyncadd [#allocation6], 0
      %s41 = sshll.u32 %s2, 4
      %s42 = int_to_ptr.hbm [resolvable:$true] %s41
      %s43 = sshll.u32 [#allocation7], 4
      %s44 = int_to_ptr.vmem [resolvable:$true] %s43
      %49 = dma.hbm_to_vmem [thread:$0]  %s42, 384, %s44, [#allocation6], 128, 128, 8
    $region13: #{tpu_custom_call.1} parent=1 // pred_fallthru
      _
    // Predicated region
    $region14: #{tpu_custom_call.1} parent=1 // pred_check
      _
    $region15: #{tpu_custom_call.1} parent=1 // pred_check_branch
      %51 = sbr.rel (0) target = $region17
    $region16: #{tpu_custom_call.1} parent=1 // pred_region
      %53 = dma.done [#allocation3], 384
    $region17: #{tpu_custom_call.1} parent=1 // pred_fallthru
      _
    // Predicated region
    $region18: #{tpu_custom_call.1} parent=1 // pred_check
      _
    $region19: #{tpu_custom_call.1} parent=1 // pred_check_branch
      %55 = sbr.rel (0) target = $region21
    $region20: #{tpu_custom_call.1} parent=1 // pred_region
      %57 = dma.done [#allocation6], 384
    $region21: #{tpu_custom_call.1} parent=1 // pred_fallthru
      _
    // Predicated region
    $region22: #{tpu_custom_call.1} parent=1 // pred_check
      _
    $region23: #{tpu_custom_call.1} parent=1 // pred_check_branch
      %59 = sbr.rel (0) target = $region25
    $region24: #{tpu_custom_call.1} parent=1 // pred_region
      %61 = dma.done [#allocation6], 384
    $region25: #{tpu_custom_call.1} parent=1 // pred_fallthru
      _
    %v62 = vld [vmem:[#allocation2] sm:$0xff]
    %v63 = vld [vmem:[#allocation2 + $0x8] sm:$0xff]
    %v64 = vld [vmem:[#allocation2 + $0x10] sm:$0xf]
    %v65 = vld [vmem:[#allocation5] sm:$0xff]
    %v66 = vld [vmem:[#allocation5 + $0x8] sm:$0xff]
    %v67 = vld [vmem:[#allocation5 + $0x10] sm:$0xf]
    %v68 = vld [vmem:[#allocation7] sm:$0xff]
    %v69 = vld [vmem:[#allocation7 + $0x8] sm:$0xff]
    %v70 = vld [vmem:[#allocation7 + $0x10] sm:$0xf]
    %v71 = vsub.f32 %v62, %v65
    %v72 = vsub.f32 %v63, %v66
    %v73 = vsub.f32 %v64, %v67
    %v74 = vmul.f32 %v71, %v71
    %v75 = vmul.f32 %v72, %v72
    %v76 = vmul.f32 %v73, %v73
    %v77 = vsub.f32 %v62, %v68
    %v78 = vsub.f32 %v63, %v69
    %v79 = vsub.f32 %v64, %v70
    %v80 = vmul.f32 %v77, %v77
    %v81 = vmul.f32 %v78, %v78
    %v82 = vmul.f32 %v79, %v79
    %v83 = vsub.f32 %v74, %v80
    %v84 = vsub.f32 %v75, %v81
    %v85 = vsub.f32 %v76, %v82
    %86 = vadd.xlane.f32.xlu0 %v83
    %v87 = vpop.xlane.xlu0 %86
    %88 = vadd.xlane.f32.xlu0 %v84
    %v89 = vpop.xlane.xlu0 %88
    %vm90 = vcmask 1043456
    %v91 = vsel %vm90, %v85, 0.0
    %92 = vadd.xlane.f32.xlu0 %v91
    %v93 = vpop.xlane.xlu0 %92
    %v94 = vadd.f32 %v87, 0.3
    %v95 = vadd.f32 %v89, 0.3
    %v96 = vadd.f32 %v93, 0.3
    %v97 = vmax.f32 %v94, 0.0
    %v98 = vmax.f32 %v95, 0.0
    %v99 = vmax.f32 %v96, 0.0
    %vm100 = vcmask 7168
    %v101 = vsel %vm100, %v97, 0.0
    %v102 = vsel %vm100, %v98, 0.0
    %v103 = vadd.f32 %v101, %v102
    %vm104 = vcmask 3072
    %v105 = vsel %vm104, %v99, 0.0
    %v106 = vadd.f32 %v103, %v105
    %107 = vadd.xlane.f32.xlu0 %v106
    %v108 = vpop.xlane.xlu0 %107
    %v109 = vrot.slane %v108, 4
    %v110 = vadd.f32 %v108, %v109
    %v111 = vrot.slane %v110, 2
    %v112 = vadd.f32 %v110, %v111
    %v113 = vrot.slane %v112, 1
    %v114 = vadd.f32 %v112, %v113
    %s115 = vtos %v114
    %v116 = vstv %s115
    %vm117 = vcmask 0
    %118 = vst.msk [vmem:[#allocation8] sm:$0x1] %vm117, %v116
    // Predicated region
    $region26: #{tpu_custom_call.1} parent=1 // pred_check
      _
    $region27: #{tpu_custom_call.1} parent=1 // pred_check_branch
      %120 = sbr.rel (0) target = $region29
    $region28: #{tpu_custom_call.1} parent=1 // pred_region
      %122 = vsyncadd [#allocation4], 0
      %s124 = sshll.u32 [#allocation8], 4
      %s125 = int_to_ptr.vmem [resolvable:$true] %s124
      %s126 = sshll.u32 %s3, 4
      %s127 = int_to_ptr.hbm [resolvable:$true] %s126
      %129 = dma.vmem_to_hbm [thread:$0]  %s125, 16, %s127, [#allocation4]
    $region29: #{tpu_custom_call.1} parent=1 // pred_fallthru
      _
    // Predicated region
    $region30: #{tpu_custom_call.1} parent=1 // pred_check
      _
    $region31: #{tpu_custom_call.1} parent=1 // pred_check_branch
      %131 = sbr.rel (0) target = $region33
    $region32: #{tpu_custom_call.1} parent=1 // pred_region
      %133 = dma.done [#allocation4], 16
    $region33: #{tpu_custom_call.1} parent=1 // pred_fallthru
      _
    %134 = vsyncpa [#allocation3], 1
    %135 = vsyncpa [#allocation6], 1
    %136 = vsyncpa [#allocation4], 1

</llo_original>
